<compile_context>
chip_gen: v6e
topology: v6e:2x2x1
jax: 0.10.0
libtpu: 0.0.40
codegen_flags: <defaults>
</compile_context>

<pallas_src>
import functools

import jax
import jax.numpy as jnp
import numpy as np
from jax.experimental import pallas as pl
from jax.experimental.pallas import tpu as pltpu


def _round_up(x, m):
    return ((x + m - 1) // m) * m


def _pad2(x, rows, cols):
    return jnp.pad(x, ((0, rows - x.shape[0]), (0, cols - x.shape[1])))


def _xavier_uniform(key, shape):
    fan_in, fan_out = shape[-2], shape[-1]
    limit = float(np.sqrt(6.0 / (fan_in + fan_out)))
    return jax.random.uniform(key, shape, jnp.float32, -limit, limit)


# --------------------------------------------------------------------------- #
# Kernels
# --------------------------------------------------------------------------- #
def input_layer_kernel(x_ref, w_ref, b_ref, o_ref):
    # h0 = relu(x @ emb_w + input_bias)   (EmbeddingBag 'sum' == multi-hot matmul)
    h = jnp.dot(x_ref[...], w_ref[...], preferred_element_type=jnp.float32)
    o_ref[...] = jnp.maximum(h + b_ref[...], 0.0).astype(o_ref.dtype)


def gcn_layer_kernel(adj_ref, hk_ref, hi_ref, sw_ref, w_ref, b_ref, o_ref,
                     acc_ref, *, residual):
    # grid = (row tiles, k tiles); k is the reduction over source nodes.
    k = pl.program_id(1)

    @pl.when(k == 0)
    def _():
        acc_ref[...] = jnp.zeros_like(acc_ref)

    # ppi aggregation: acc += A_ppi[row_tile, k_tile] @ h[k_tile, :]
    acc_ref[...] += jnp.dot(adj_ref[...], hk_ref[...],
                            preferred_element_type=jnp.float32)

    @pl.when(k == pl.num_programs(1) - 1)
    def _():
        # NodeUpdate: relu(agg @ W + b), then residual = per-node self-loop scale.
        upd = jnp.dot(acc_ref[...].astype(jnp.bfloat16), w_ref[...],
                      preferred_element_type=jnp.float32)
        upd = jnp.maximum(upd + b_ref[...], 0.0)
        if residual:
            upd = upd + sw_ref[...] * hi_ref[...].astype(jnp.float32)
        o_ref[...] = upd.astype(o_ref.dtype)


def gcn_last_layer_fused_kernel(adj_ref, hk_ref, hi_ref, sw_ref, w_ref, b_ref,
                                ow_ref, ob_ref, o_ref, acc_ref, *, residual):
    # Last GCN layer with the output Linear fused into the finalize:
    # o = (relu(agg @ W + b) + res) @ W_out + b_out    (no HBM roundtrip of h)
    k = pl.program_id(1)

    @pl.when(k == 0)
    def _():
        acc_ref[...] = jnp.zeros_like(acc_ref)

    acc_ref[...] += jnp.dot(adj_ref[...], hk_ref[...],
                            preferred_element_type=jnp.float32)

    @pl.when(k == pl.num_programs(1) - 1)
    def _():
        upd = jnp.dot(acc_ref[...].astype(jnp.bfloat16), w_ref[...],
                      preferred_element_type=jnp.float32)
        upd = jnp.maximum(upd + b_ref[...], 0.0)
        if residual:
            upd = upd + sw_ref[...] * hi_ref[...].astype(jnp.float32)
        logits = jnp.dot(upd.astype(jnp.bfloat16), ow_ref[...],
                         preferred_element_type=jnp.float32)
        o_ref[...] = (logits + ob_ref[...]).astype(o_ref.dtype)


def output_layer_kernel(h_ref, w_ref, b_ref, o_ref):
    o = jnp.dot(h_ref[...], w_ref[...], preferred_element_type=jnp.float32)
    o_ref[...] = (o + b_ref[...]).astype(o_ref.dtype)


# --------------------------------------------------------------------------- #
# Wrapper
# --------------------------------------------------------------------------- #
def gcn_forward(x_dense, emb_w, in_b, self_w, adj_ppi, ppi_w, ppi_b,
                out_w, out_b, *, num_gcn, residual, tile_n=256,
                vmem_limit_bytes=32 * 1024 * 1024):
    N, V = x_dense.shape
    H = emb_w.shape[1]
    L = out_w.shape[1]

    # Lane-dense hidden/label dims; bf16-sublane-aligned node dim.
    Hp = _round_up(H, 128)
    Lp = _round_up(L, 128)
    if N <= tile_n:
        t = _round_up(N, 16)            # one tile covers all (padded) nodes
        Np = t
    else:
        assert tile_n % 128 == 0, "tile_n must be a multiple of 128"
        t = tile_n
        Np = _round_up(N, t)
    n_row_tiles = Np // t

    f32, bf16 = jnp.float32, jnp.bfloat16

    # Pad + cast. Zero padding is exact: padded node rows/cols and hidden lanes
    # never contaminate the valid region and are sliced off at the end.
    xb = _pad2(x_dense.astype(f32), Np, V).astype(bf16)
    ewb = _pad2(emb_w, V, Hp).astype(bf16)
    inb = _pad2(in_b.reshape(1, H), 1, Hp).astype(f32)
    adjb = jnp.pad(adj_ppi, ((0, 0), (0, Np - N), (0, Np - N))).astype(bf16)
    swb = jnp.pad(self_w.reshape(num_gcn, N, 1),
                  ((0, 0), (0, Np - N), (0, 0))).astype(f32)
    pwb = jnp.pad(ppi_w, ((0, 0), (0, Hp - H), (0, Hp - H))).astype(bf16)
    pbb = jnp.pad(ppi_b.reshape(num_gcn, 1, H),
                  ((0, 0), (0, 0), (0, Hp - H))).astype(f32)
    owb = _pad2(out_w, Hp, Lp).astype(bf16)
    obb = _pad2(out_b.reshape(1, L), 1, Lp).astype(f32)

    cp_rows = pltpu.CompilerParams(dimension_semantics=("parallel",),
                                   vmem_limit_bytes=vmem_limit_bytes)
    cp_layer = pltpu.CompilerParams(
        dimension_semantics=("parallel", "arbitrary"),
        vmem_limit_bytes=vmem_limit_bytes)

    # ---- input layer: h0 = relu(x @ emb_w + b) ---------------------------- #
    h = pl.pallas_call(
        input_layer_kernel,
        out_shape=jax.ShapeDtypeStruct((Np, Hp), bf16),
        grid_spec=pltpu.PrefetchScalarGridSpec(
            num_scalar_prefetch=0,
            grid=(n_row_tiles,),
            in_specs=[
                pl.BlockSpec((t, V), lambda i: (i, 0)),
                pl.BlockSpec((V, Hp), lambda i: (0, 0)),
                pl.BlockSpec((1, Hp), lambda i: (0, 0)),
            ],
            out_specs=pl.BlockSpec((t, Hp), lambda i: (i, 0)),
        ),
        compiler_params=cp_rows,
    )(xb, ewb, inb)

    if num_gcn > 0:
        # ---- intermediate GCN layers (aggregation + NodeUpdate + residual) - #
        if num_gcn > 1:
            layer_call = pl.pallas_call(
                functools.partial(gcn_layer_kernel, residual=residual),
                out_shape=jax.ShapeDtypeStruct((Np, Hp), bf16),
                grid_spec=pltpu.PrefetchScalarGridSpec(
                    num_scalar_prefetch=0,
                    grid=(n_row_tiles, n_row_tiles),
                    in_specs=[
                        pl.BlockSpec((t, t), lambda i, k: (i, k)),    # A_ppi[l]
                        pl.BlockSpec((t, Hp), lambda i, k: (k, 0)),   # h, source tile
                        pl.BlockSpec((t, Hp), lambda i, k: (i, 0)),   # h, row tile (residual)
                        pl.BlockSpec((t, 1), lambda i, k: (i, 0)),    # self-loop weights
                        pl.BlockSpec((Hp, Hp), lambda i, k: (0, 0)),  # ppi_linear W^T
                        pl.BlockSpec((1, Hp), lambda i, k: (0, 0)),   # ppi_linear bias
                    ],
                    out_specs=pl.BlockSpec((t, Hp), lambda i, k: (i, 0)),
                    scratch_shapes=[pltpu.VMEM((t, Hp), jnp.float32)],
                ),
                compiler_params=cp_layer,
            )
            for l in range(num_gcn - 1):
                h = layer_call(adjb[l], h, h, swb[l], pwb[l], pbb[l])

        # ---- final GCN layer fused with the output Linear ------------------ #
        last = num_gcn - 1
        out = pl.pallas_call(
            functools.partial(gcn_last_layer_fused_kernel, residual=residual),
            out_shape=jax.ShapeDtypeStruct((Np, Lp), jnp.float32),
            grid_spec=pltpu.PrefetchScalarGridSpec(
                num_scalar_prefetch=0,
                grid=(n_row_tiles, n_row_tiles),
                in_specs=[
                    pl.BlockSpec((t, t), lambda i, k: (i, k)),        # A_ppi[last]
                    pl.BlockSpec((t, Hp), lambda i, k: (k, 0)),       # h, source tile
                    pl.BlockSpec((t, Hp), lambda i, k: (i, 0)),       # h, row tile (residual)
                    pl.BlockSpec((t, 1), lambda i, k: (i, 0)),        # self-loop weights
                    pl.BlockSpec((Hp, Hp), lambda i, k: (0, 0)),      # ppi_linear W^T
                    pl.BlockSpec((1, Hp), lambda i, k: (0, 0)),       # ppi_linear bias
                    pl.BlockSpec((Hp, Lp), lambda i, k: (0, 0)),      # output W^T
                    pl.BlockSpec((1, Lp), lambda i, k: (0, 0)),       # output bias
                ],
                out_specs=pl.BlockSpec((t, Lp), lambda i, k: (i, 0)),
                scratch_shapes=[pltpu.VMEM((t, Hp), jnp.float32)],
            ),
            compiler_params=cp_layer,
        )(adjb[last], h, h, swb[last], pwb[last], pbb[last], owb, obb)
    else:
        # ---- output layer: out = h @ W_out + b_out ------------------------- #
        out = pl.pallas_call(
            output_layer_kernel,
            out_shape=jax.ShapeDtypeStruct((Np, Lp), jnp.float32),
            grid_spec=pltpu.PrefetchScalarGridSpec(
                num_scalar_prefetch=0,
                grid=(n_row_tiles,),
                in_specs=[
                    pl.BlockSpec((t, Hp), lambda i: (i, 0)),
                    pl.BlockSpec((Hp, Lp), lambda i: (0, 0)),
                    pl.BlockSpec((1, Lp), lambda i: (0, 0)),
                ],
                out_specs=pl.BlockSpec((t, Lp), lambda i: (i, 0)),
            ),
            compiler_params=cp_rows,
        )(h, owb, obb)

    return out[:N, :L]


# --------------------------------------------------------------------------- #
# Pure-JAX reference (emulates the kernel's bf16 storage/input quantization;
# matmul accumulation is f32 in both).
# --------------------------------------------------------------------------- #
def gcn_reference(x_dense, emb_w, in_b, self_w, adj_ppi, ppi_w, ppi_b,
                  out_w, out_b, *, num_gcn, residual):
    bf = lambda a: a.astype(jnp.bfloat16).astype(jnp.float32)
    h = jax.nn.relu(bf(x_dense) @ bf(emb_w) + in_b.reshape(1, -1))
    h = bf(h)
    for l in range(num_gcn):
        agg = bf(adj_ppi[l]) @ h
        upd = jax.nn.relu(bf(agg) @ bf(ppi_w[l]) + ppi_b[l].reshape(1, -1))
        if residual:
            upd = upd + self_w[l][:, None] * h
        h = bf(upd)
    return h @ bf(out_w) + out_b.reshape(1, -1)


if __name__ == "__main__":
    def build_and_check(key, *, N, V, H, LBL, NUM_GCN, NNZ, RESIDUAL, tile_n):
        keys = jax.random.split(key, 8)

        # --- EmbeddingBag inputs (indices, offsets, per_sample_weights) ----
        indices = jax.random.randint(keys[0], (N * NNZ,), 0, V, dtype=jnp.int32)
        offsets = jnp.arange(0, N * NNZ + 1, NNZ, dtype=jnp.int32)  # include_last_offset
        psw = jax.random.uniform(keys[1], (N * NNZ,), jnp.float32, 0.1, 1.0)

        # Glue: (indices, offsets, weights) -> dense weighted multi-hot [N, V].
        pos = jnp.arange(indices.shape[0])
        node_ids = jnp.searchsorted(offsets, pos, side="right") - 1
        x_dense = jnp.zeros((N, V), jnp.float32).at[node_ids, indices].add(psw)

        # --- Parameters (mirroring reset_parameters) ------------------------
        emb_w = _xavier_uniform(keys[2], (V, H))               # EmbeddingBag.weight
        in_b = jnp.zeros((H,), jnp.float32)                    # input_bias (zeros)
        ppi_w = _xavier_uniform(keys[3], (NUM_GCN, H, H))      # NodeUpdate linear W^T
        ppi_b = jnp.zeros((NUM_GCN, H), jnp.float32)
        out_w = _xavier_uniform(keys[4], (H, LBL))             # output Linear W^T
        out_b = jnp.zeros((LBL,), jnp.float32)

        # --- Graph: dense weighted 'ppi' adjacency + self-loop weights ------
        adj_ppi = jax.random.uniform(keys[5], (NUM_GCN, N, N), jnp.float32, 0.0, 1.0)
        adj_ppi = adj_ppi * (adj_ppi > 0.6)                    # sparse-ish edges
        adj_ppi = adj_ppi / jnp.maximum(adj_ppi.sum(-1, keepdims=True), 1.0)
        self_w = jax.random.uniform(keys[6], (NUM_GCN, N), jnp.float32, 0.5, 1.5)

        out = gcn_forward(x_dense, emb_w, in_b, self_w, adj_ppi, ppi_w, ppi_b,
                          out_w, out_b, num_gcn=NUM_GCN, residual=RESIDUAL,
                          tile_n=tile_n)
        out = jax.block_until_ready(out)

        ref = gcn_reference(x_dense, emb_w, in_b, self_w, adj_ppi, ppi_w, ppi_b,
                            out_w, out_b, num_gcn=NUM_GCN, residual=RESIDUAL)
        np.testing.assert_allclose(np.asarray(out), np.asarray(ref),
                                   rtol=1e-2, atol=1e-2)

    root = jax.random.PRNGKey(0)
    # Small shapes implied by the module (single-tile fast path).
    build_and_check(jax.random.fold_in(root, 0), N=16, V=64, H=32, LBL=16,
                    NUM_GCN=2, NNZ=4, RESIDUAL=True, tile_n=256)
    # Multi-tile path: exercises the (row-tile, k-tile) accumulator pipeline
    # plus the fused final-layer + output-projection kernel.
    build_and_check(jax.random.fold_in(root, 1), N=256, V=64, H=32, LBL=16,
                    NUM_GCN=2, NNZ=4, RESIDUAL=True, tile_n=128)
    # num_gcn == 0 path: standalone output-layer kernel.
    build_and_check(jax.random.fold_in(root, 2), N=16, V=64, H=32, LBL=16,
                    NUM_GCN=0, NNZ=4, RESIDUAL=True, tile_n=256)

    print("KERNEL_OK")
</pallas_src>

<mosaic_0001>
module attributes {stable_mosaic.version = 11 : i64} {
  func.func @input_layer_kernel(%arg0: i32, %arg1: memref<16x64xbf16, #tpu.memory_space<vmem>>, %arg2: memref<64x128xbf16, #tpu.memory_space<vmem>>, %arg3: memref<1x128xf32, #tpu.memory_space<vmem>>, %arg4: memref<16x128xbf16, #tpu.memory_space<vmem>>) attributes {dimension_semantics = [#tpu.dimension_semantics<parallel>], iteration_bounds = array<i64: 1>, scalar_prefetch = 0 : i64, scratch_operands = 0 : i64, tpu.core_type = #tpu.core_type<tc>, window_params = [{transform_indices = @transform_0, window_bounds = array<i64: 16, 64>}, {pipeline_mode = #tpu.pipeline_mode<synchronous>, transform_indices = @transform_1, window_bounds = array<i64: 64, 128>}, {pipeline_mode = #tpu.pipeline_mode<synchronous>, transform_indices = @transform_2, window_bounds = array<i64: 1, 128>}, {transform_indices = @transform_3, window_bounds = array<i64: 16, 128>}]} {
    %c0 = arith.constant 0 : index
    %c0_0 = arith.constant 0 : index
    %0 = vector.load %arg1[%c0, %c0_0] : memref<16x64xbf16, #tpu.memory_space<vmem>>, vector<16x64xbf16>
    %c0_1 = arith.constant 0 : index
    %c0_2 = arith.constant 0 : index
    %1 = vector.load %arg2[%c0_1, %c0_2] : memref<64x128xbf16, #tpu.memory_space<vmem>>, vector<64x128xbf16>
    %cst = arith.constant dense<0.000000e+00> : vector<16x128xf32>
    %2 = tpu.matmul %0, %1, %cst {dimension_numbers = #tpu.dot_dimension_numbers<[1], [0], [0], [1], [0, 0, 1, 1], [], []>} : vector<16x64xbf16>, vector<64x128xbf16>, vector<16x128xf32> -> vector<16x128xf32>
    %c0_3 = arith.constant 0 : index
    %c0_4 = arith.constant 0 : index
    %3 = vector.load %arg3[%c0_3, %c0_4] : memref<1x128xf32, #tpu.memory_space<vmem>>, vector<1x128xf32>
    %4 = vector.broadcast %3 : vector<1x128xf32> to vector<16x128xf32>
    %5 = arith.addf %2, %4 : vector<16x128xf32>
    %cst_5 = arith.constant 0.000000e+00 : f32
    %6 = vector.broadcast %cst_5 : f32 to vector<16x128xf32>
    %7 = arith.maximumf %5, %6 : vector<16x128xf32>
    %8 = arith.truncf %7 : vector<16x128xf32> to vector<16x128xbf16>
    %c0_6 = arith.constant 0 : index
    %c0_7 = arith.constant 0 : index
    %9 = vector.load %arg4[%c0_6, %c0_7] : memref<16x128xbf16, #tpu.memory_space<vmem>>, vector<16x128xbf16>
    tpu.vector_store %arg4[%c0_6, %c0_7], %8 {strides = array<i32>} : memref<16x128xbf16, #tpu.memory_space<vmem>>, vector<16x128xbf16>,
    return
  }
  func.func @transform_0(%arg0: i32) -> (i32, i32) {
    %c0_i32 = arith.constant 0 : i32
    %c0_i32_0 = arith.constant 0 : i32
    return %arg0, %c0_i32 : i32, i32
  }
  func.func @transform_1(%arg0: i32) -> (i32, i32) {
    %c0_i32 = arith.constant 0 : i32
    %c0_i32_0 = arith.constant 0 : i32
    %c0_i32_1 = arith.constant 0 : i32
    return %c0_i32, %c0_i32_0 : i32, i32
  }
  func.func @transform_2(%arg0: i32) -> (i32, i32) {
    %c0_i32 = arith.constant 0 : i32
    %c0_i32_0 = arith.constant 0 : i32
    %c0_i32_1 = arith.constant 0 : i32
    return %c0_i32, %c0_i32_0 : i32, i32
  }
  func.func @transform_3(%arg0: i32) -> (i32, i32) {
    %c0_i32 = arith.constant 0 : i32
    %c0_i32_0 = arith.constant 0 : i32
    return %arg0, %c0_i32 : i32, i32
  }
}

</mosaic_0001>

<llo_original>
// kernel: tpu_custom_call.1
$region0: #{tpu_custom_call.1}
  #allocation0 [shape = 'u32[]', space=smem, size = 0x4, offset = 0x4, fixed_abs, tag = 'smem constant byte address 0x4 - core index']
  #allocation1 [shape = 'u32[144,128]{1,0:T(1,128)}', space=vmem, size = 0x12000, scoped, tag = 'internal scratch']
  %s0 = inlined_call_operand.hbm [shape: bf16[16,64], index: 0, kind: input, shape index: {}]
  %s1 = inlined_call_operand.hbm [shape: bf16[64,128], index: 1, kind: input, shape index: {}]
  %s2 = inlined_call_operand.vmem [shape: f32[1,128], index: 2, kind: input, shape index: {}]
  %s3 = inlined_call_operand.hbm [shape: bf16[16,128], index: 3, kind: output, shape index: {}]
  %s4 = sld [smem:[#allocation0]]
  $region30: #{tpu_custom_call.1} parent=0
    _
  %s6 = ssub.s32 1, %s4
  %s7 = scalar_select 0, %s6, %s4
  $region1: #{tpu_custom_call.1} parent=0
    #allocation2 [shape = 'u8[4096]{0}', space=vmem, size = 0x1000, scoped, tag = 'input window, operand 0, single buffered']
    #allocation3 [shape = 's32[1]{0}', space=sflag, size = 0x4, scoped, tag = 'scoped memory for tpu_custom_call.1']
    #allocation4 [shape = 's32[1]{0}', space=sflag, size = 0x4, scoped, tag = 'scoped memory for tpu_custom_call.1']
    #allocation5 [shape = 'u8[16384]{0}', space=vmem, size = 0x4000, scoped, tag = 'input window, operand 1, single buffered']
    #allocation6 [shape = 's32[1]{0}', space=sflag, size = 0x4, scoped, tag = 'scoped memory for tpu_custom_call.1']
    #allocation7 [shape = 'u8[4096]{0}', space=vmem, size = 0x1000, scoped, tag = 'output window, operand 0, single buffered']
    %8 = vsyncpa [#allocation3], 0
    %9 = vsyncpa [#allocation6], 0
    %10 = vsyncpa [#allocation4], 0
    // Predicated region
    $region2: #{tpu_custom_call.1} parent=1 // pred_check
      _
    $region3: #{tpu_custom_call.1} parent=1 // pred_check_branch
      %12 = sbr.rel (0) target = $region5
    $region4: #{tpu_custom_call.1} parent=1 // pred_region
      %s14 = ssub.s32 128, 128
      %15 = vsyncadd [#allocation3], %s14
      %s16 = sshll.u32 [#allocation2], 4
      %s17 = int_to_ptr.vmem [resolvable:$true] %s16
      %22 = dma.hbm_to_vmem [thread:$0]  %s0, 128, %s17, [#allocation3], 64, 64, 4
    $region5: #{tpu_custom_call.1} parent=1 // pred_fallthru
      _
    // Predicated region
    $region6: #{tpu_custom_call.1} parent=1 // pred_check
      _
    $region7: #{tpu_custom_call.1} parent=1 // pred_check_branch
      %24 = sbr.rel (0) target = $region9
    $region8: #{tpu_custom_call.1} parent=1 // pred_region
      %s26 = ssub.s32 512, 512
      %27 = vsyncadd [#allocation6], %s26
      %s28 = sshll.u32 [#allocation5], 4
      %s29 = int_to_ptr.vmem [resolvable:$true] %s28
      %34 = dma.hbm_to_vmem [thread:$0]  %s1, 512, %s29, [#allocation6], 64, 64, 4
    $region9: #{tpu_custom_call.1} parent=1 // pred_fallthru
      _
    // Predicated region
    $region10: #{tpu_custom_call.1} parent=1 // pred_check
      _
    $region11: #{tpu_custom_call.1} parent=1 // pred_check_branch
      %36 = sbr.rel (0) target = $region13
    $region12: #{tpu_custom_call.1} parent=1 // pred_region
      _
    $region13: #{tpu_custom_call.1} parent=1 // pred_fallthru
      _
    // Predicated region
    $region14: #{tpu_custom_call.1} parent=1 // pred_check
      _
    $region15: #{tpu_custom_call.1} parent=1 // pred_check_branch
      %38 = sbr.rel (0) target = $region17
    $region16: #{tpu_custom_call.1} parent=1 // pred_region
      %39 = dma.done [#allocation3], 128
    $region17: #{tpu_custom_call.1} parent=1 // pred_fallthru
      _
    // Predicated region
    $region18: #{tpu_custom_call.1} parent=1 // pred_check
      _
    $region19: #{tpu_custom_call.1} parent=1 // pred_check_branch
      %41 = sbr.rel (0) target = $region21
    $region20: #{tpu_custom_call.1} parent=1 // pred_region
      %42 = dma.done [#allocation6], 512
    $region21: #{tpu_custom_call.1} parent=1 // pred_fallthru
      _
    %v44 = vld [vmem:[#allocation2] sm:$0xf]
    %v45 = vld [vmem:[#allocation2 + $0x4] sm:$0xf]
    %v46 = vld [vmem:[#allocation5] sm:$0xf]
    %v47 = vld [vmem:[#allocation5 + $0x4] sm:$0xf]
    %v48 = vld [vmem:[#allocation5 + $0x8] sm:$0xf]
    %v49 = vld [vmem:[#allocation5 + $0xc] sm:$0xf]
    %v50 = vld [vmem:[#allocation5 + $0x10] sm:$0xf]
    %v51 = vld [vmem:[#allocation5 + $0x14] sm:$0xf]
    %v52 = vld [vmem:[#allocation5 + $0x18] sm:$0xf]
    %v53 = vld [vmem:[#allocation5 + $0x1c] sm:$0xf]
    %v54 = vld [vmem:[%s2] sm:$0x1]
    %v56 = vlaneseq
    %v57 = vshrl.u32 %v56, 7
    %v58 = vsub.s32 0, %v57
    %v59 = vrot.slane %v54, %v58
    %v63 = vunpack.c.l.b16 %v44
    %v64 = vunpack.c.l.b16 %v45
    %v65 = vpack.c.b16 %v64, %v63
    %v74 = vunpack.c.l.b16 %v46
    %v75 = vunpack.c.l.b16 %v47
    %v76 = vunpack.c.l.b16 %v48
    %v77 = vunpack.c.l.b16 %v49
    %v78 = vunpack.c.l.b16 %v50
    %v79 = vunpack.c.l.b16 %v51
    %v80 = vunpack.c.l.b16 %v52
    %v81 = vunpack.c.l.b16 %v53
    %v82 = vpack.c.b16 %v75, %v74
    %v83 = vpack.c.b16 %v77, %v76
    %v84 = vpack.c.b16 %v79, %v78
    %v85 = vpack.c.b16 %v81, %v80
    %vm90 = vcmask 523264
    %v92 = vsel %vm90, %v65, 0
    %94 = vmatprep.subr.bf16.mxu0 0
    %95 = vmatpush1.bf16.msra.mxu0 0
    %96 = vmatprep.subr.bf16.mxu0 0
    %97 = vmatpush1.bf16.msra.mxu0 0
    %98 = vmatprep.subr.bf16.mxu0 0
    %99 = vmatpush1.bf16.msra.mxu0 0
    %100 = vmatprep.subr.bf16.mxu0 0
    %101 = vmatpush1.bf16.msra.mxu0 0
    %102 = vmatprep.subr.bf16.mxu0 0
    %103 = vmatpush1.bf16.msra.mxu0 %v85
    %104 = vmatprep.subr.bf16.mxu0 0
    %105 = vmatpush1.bf16.msra.mxu0 %v84
    %106 = vmatprep.subr.bf16.mxu0 0
    %107 = vmatpush1.bf16.msra.mxu0 %v83
    %108 = vmatprep.subr.bf16.mxu0 0
    %109 = vmatpush1.bf16.msra.mxu0 %v82
    %110 = vmatprep.subr.bf16.mxu0 0
    %111 = vmatpush2.bf16.msra.mxu0 0
    %112 = vmatprep.subr.bf16.mxu0 0
    %113 = vmatpush2.bf16.msra.mxu0 0
    %114 = vmatprep.subr.bf16.mxu0 0
    %115 = vmatpush2.bf16.msra.mxu0 0
    %116 = vmatprep.subr.bf16.mxu0 0
    %117 = vmatpush2.bf16.msra.mxu0 0
    %118 = vmatprep.subr.bf16.mxu0 0
    %119 = vmatpush2.bf16.msra.mxu0 0
    %120 = vmatprep.subr.bf16.mxu0 0
    %121 = vmatpush2.bf16.msra.mxu0 0
    %122 = vmatprep.subr.bf16.mxu0 0
    %123 = vmatpush2.bf16.msra.mxu0 0
    %124 = vmatprep.subr.bf16.mxu0 0
    %125 = vmatpush2.bf16.msra.mxu0 0
    %126 = vmatprep.mubr.bf16.mxu0 0
    %127 = vmatmul.mubr.bf16.gmra.mxu0 %v92
    %v128 = vpop.f32.mrf.mxu0
    %v129 = vadd.f32 %v59, %v128
    %v130 = vpop.f32.mrf.mxu0
    %v131 = vpop.f32.mrf.mxu0
    %v132 = vadd.f32 %v59, %v131
    %v133 = vpop.f32.mrf.mxu0
    %134 = vdwg.mxu0
    %v135 = vmax.f32 %v129, 0.0
    %v136 = vmax.f32 %v132, 0.0
    %v137 = vpack.c.bf16 %v136, %v135
    %v139 = vunpack.c.l.b16 %v137
    %v140 = vunpack.c.h.b16 %v137
    %v141 = vpack.c.b16 %v139, %v139
    %v142 = vpack.c.b16 %v140, %v140
    %145 = vst [vmem:[#allocation7] sm:$0xf] %v141
    %146 = vst [vmem:[#allocation7 + $0x4] sm:$0xf] %v142
    // Predicated region
    $region22: #{tpu_custom_call.1} parent=1 // pred_check
      _
    $region23: #{tpu_custom_call.1} parent=1 // pred_check_branch
      %148 = sbr.rel (0) target = $region25
    $region24: #{tpu_custom_call.1} parent=1 // pred_region
      %s150 = ssub.s32 128, 128
      %151 = vsyncadd [#allocation4], %s150
      %s152 = sshll.u32 [#allocation7], 4
      %s153 = int_to_ptr.vmem [resolvable:$true] %s152
      %158 = dma.vmem_to_hbm [thread:$0]  %s153, 128, %s3, [#allocation4], 64, 64, 4
    $region25: #{tpu_custom_call.1} parent=1 // pred_fallthru
      _
    // Predicated region
    $region26: #{tpu_custom_call.1} parent=1 // pred_check
      _
    $region27: #{tpu_custom_call.1} parent=1 // pred_check_branch
      %160 = sbr.rel (0) target = $region29
    $region28: #{tpu_custom_call.1} parent=1 // pred_region
      %161 = dma.done [#allocation4], 128
    $region29: #{tpu_custom_call.1} parent=1 // pred_fallthru
      _
    %162 = vsyncpa [#allocation3], 1
    %163 = vsyncpa [#allocation6], 1
    %164 = vsyncpa [#allocation4], 1

</llo_original>
